<compile_context>
chip_gen: v6e
topology: v6e:2x2x1
jax: 0.10.0
libtpu: 0.0.40
codegen_flags: <defaults>
</compile_context>

<pallas_src>
import functools

import jax
import jax.numpy as jnp
from jax.experimental import pallas as pl
from jax.experimental.pallas import tpu as pltpu


def gat_kernel(poi_ref, ent_ref, adj_ref, wa1_ref, wa2_ref, out_ref, *, alpha, concat):
    poi = poi_ref[...].astype(jnp.float32)        # (TN, Fin)
    ent = ent_ref[...]                            # (TN, E, Fin)  native dtype, promoted per-op
    adj = adj_ref[...]                            # (TN, E)
    wa1 = wa1_ref[...].astype(jnp.float32)        # (1, Fin) == W @ a[:Fout]  (pre-folded)
    wa2 = wa2_ref[...].astype(jnp.float32)        # (1, Fin) == W @ a[Fout:]  (pre-folded)

    # e = leakyrelu(Wh @ a1 + We @ a2) with W folded into the attention vectors:
    # VPU multiply + lane (feature) reduction, no MXU matvec with a 1-wide RHS.
    e_poi = jnp.sum(poi * wa1, axis=-1, keepdims=True)            # (TN, 1)
    e_ent = jnp.sum(ent * wa2[:, None, :], axis=-1)               # (TN, E), f32 accum
    e = e_poi + e_ent
    e = jnp.where(e > 0, e, alpha * e)                            # LeakyReLU(alpha)

    # Masked softmax over the entity axis (dim=1).
    att = jnp.where(adj > 0, e, jnp.full_like(e, -9e15))
    att = jnp.exp(att - jnp.max(att, axis=1, keepdims=True))
    # Exact divide: denominator is only (TN, 1); the approximate EUP reciprocal was
    # the source of the previous correctness failure and buys nothing here.
    att = att / jnp.sum(att, axis=1, keepdims=True)
    # TODO(synk): F.dropout on inputs / attention weights is identity in eval mode;
    # training-mode RNG dropout is not emitted here.

    # entity_emb_weighted = bmm(att, entity_embs); residual add of the raw poi embedding.
    h = jnp.sum(att[:, :, None] * ent, axis=1) + poi              # (TN, Fin), f32 accum
    if concat:
        # ELU, with exp clamped so large positive h never transiently overflows.
        h = jnp.where(h > 0, h, jnp.exp(jnp.minimum(h, 0.0)) - 1.0)
    out_ref[...] = h.astype(out_ref.dtype)


def gat_forward(poi, ent, adj, W, a, *, alpha=0.2, concat=False, tn=256):
    """GraphAttentionLayer.forward (GAT.forward == this with concat=False, eval-mode dropout)."""
    N, fin = poi.shape
    _, e_num, _ = ent.shape
    fout = W.shape[1]

    # Fold W into the attention vectors:  (poi @ W) @ a[:Fout] == poi @ (W @ a[:Fout]).
    w_f = W.astype(jnp.float32)
    a_f = a.astype(jnp.float32)
    wa1 = (w_f @ a_f[:fout]).reshape(1, fin)
    wa2 = (w_f @ a_f[fout:]).reshape(1, fin)

    def round_up(x, m):
        return ((x + m - 1) // m) * m

    # Node tile: large (amortizes per-grid-step overhead, keeps the DMA pipeline busy),
    # multiple of 8 (sublane tiling), clamped so tiny N isn't grossly over-padded.
    # Per-row block footprint is ~(E+2)*Fin*4 + E*4 bytes, so the default tn=256 is
    # well under the scoped-VMEM default on v5e/v6e/v7x.
    tn = max(8, (tn // 8) * 8)
    tn = min(tn, round_up(N, 8))
    n_pad = round_up(N, tn)

    # Tail handling: pad N up to a multiple of tn; padded rows compute harmless zeros
    # (all-masked softmax over zero embeddings) and are sliced off below.
    if n_pad != N:
        pad = n_pad - N
        poi_p = jnp.pad(poi, ((0, pad), (0, 0)))
        ent_p = jnp.pad(ent, ((0, pad), (0, 0), (0, 0)))
        adj_p = jnp.pad(adj, ((0, pad), (0, 0)))
    else:
        poi_p, ent_p, adj_p = poi, ent, adj

    kernel = functools.partial(gat_kernel, alpha=alpha, concat=concat)
    out = pl.pallas_call(
        kernel,
        out_shape=jax.ShapeDtypeStruct((n_pad, fin), poi.dtype),
        grid_spec=pltpu.PrefetchScalarGridSpec(
            num_scalar_prefetch=0,
            grid=(n_pad // tn,),
            in_specs=[
                pl.BlockSpec((tn, fin), lambda i: (i, 0)),             # poi
                pl.BlockSpec((tn, e_num, fin), lambda i: (i, 0, 0)),   # entity embs
                pl.BlockSpec((tn, e_num), lambda i: (i, 0)),           # adj mask
                pl.BlockSpec((1, fin), lambda i: (0, 0)),              # W @ a[:Fout]
                pl.BlockSpec((1, fin), lambda i: (0, 0)),              # W @ a[Fout:]
            ],
            out_specs=pl.BlockSpec((tn, fin), lambda i: (i, 0)),
        ),
        compiler_params=pltpu.CompilerParams(
            # Node axis is embarrassingly parallel -> shards across the 2 TCs on v7x;
            # no-op on single-TC v5e/v6e.
            dimension_semantics=("parallel",),
        ),
    )(poi_p, ent_p, adj_p, wa1, wa2)
    return out[:N]


def gat_reference(poi, ent, adj, W, a, *, alpha=0.2, concat=False):
    """Pure-JAX reference of the PyTorch forward() for a correctness check."""
    fout = W.shape[1]
    Wh = poi @ W
    We = ent @ W
    e = (Wh @ a[:fout]) + (We @ a[fout:])[..., 0]
    e = jnp.where(e > 0, e, alpha * e)
    att = jnp.where(adj > 0, e, -9e15)
    att = jax.nn.softmax(att, axis=1)
    h = jnp.einsum("ne,nef->nf", att, ent) + poi
    return jax.nn.elu(h) if concat else h


def xavier_uniform(key, shape, gain):
    fan_in, fan_out = shape[0], shape[1]
    bound = gain * jnp.sqrt(6.0 / (fan_in + fan_out))
    return jax.random.uniform(key, shape, jnp.float32, -bound, bound)


if __name__ == "__main__":
    # N deliberately NOT a multiple of the tile to exercise the tail-padding path;
    # Fout != Fin is fine because W only feeds the attention logits.
    N, E, FIN, FOUT = 60, 8, 32, 48
    ALPHA = 0.2

    key = jax.random.PRNGKey(0)
    k_poi, k_ent, k_adj, k_w, k_a = jax.random.split(key, 5)

    poi = jax.random.normal(k_poi, (N, FIN), jnp.float32)
    ent = jax.random.normal(k_ent, (N, E, FIN), jnp.float32)
    adj = (jax.random.uniform(k_adj, (N, E)) > 0.3).astype(jnp.float32)

    W = xavier_uniform(k_w, (FIN, FOUT), gain=1.414)
    a = xavier_uniform(k_a, (2 * FOUT, 1), gain=1.414)

    # GAT.forward == GraphAttentionLayer.forward with concat=False (eval-mode dropouts are identity).
    out = gat_forward(poi, ent, adj, W, a, alpha=ALPHA, concat=False, tn=16)
    out = jax.block_until_ready(out)
    ref = gat_reference(poi, ent, adj, W, a, alpha=ALPHA, concat=False)
    assert out.shape == (N, FIN)
    # Exact softmax divide -> only matmul-reassociation rounding left; tight tolerance.
    assert jnp.allclose(out, ref, atol=5e-4, rtol=5e-4), float(jnp.max(jnp.abs(out - ref)))

    # Also check the layer's concat=True (ELU) path.
    out_c = jax.block_until_ready(
        gat_forward(poi, ent, adj, W, a, alpha=ALPHA, concat=True, tn=16))
    ref_c = gat_reference(poi, ent, adj, W, a, alpha=ALPHA, concat=True)
    assert jnp.allclose(out_c, ref_c, atol=5e-4, rtol=5e-4), float(jnp.max(jnp.abs(out_c - ref_c)))

    print("KERNEL_OK")
</pallas_src>

<mosaic_0001>
module attributes {stable_mosaic.version = 11 : i64} {
  func.func @gat_kernel(%arg0: i32, %arg1: memref<16x32xf32, #tpu.memory_space<vmem>>, %arg2: memref<16x8x32xf32, #tpu.memory_space<vmem>>, %arg3: memref<16x8xf32, #tpu.memory_space<vmem>>, %arg4: memref<1x32xf32, #tpu.memory_space<vmem>>, %arg5: memref<1x32xf32, #tpu.memory_space<vmem>>, %arg6: memref<16x32xf32, #tpu.memory_space<vmem>>) attributes {dimension_semantics = [#tpu.dimension_semantics<parallel>], iteration_bounds = array<i64: 4>, scalar_prefetch = 0 : i64, scratch_operands = 0 : i64, tpu.core_type = #tpu.core_type<tc>, window_params = [{transform_indices = @transform_0, window_bounds = array<i64: 16, 32>}, {transform_indices = @transform_1, window_bounds = array<i64: 16, 8, 32>}, {transform_indices = @transform_2, window_bounds = array<i64: 16, 8>}, {pipeline_mode = #tpu.pipeline_mode<synchronous>, transform_indices = @transform_3, window_bounds = array<i64: 1, 32>}, {pipeline_mode = #tpu.pipeline_mode<synchronous>, transform_indices = @transform_4, window_bounds = array<i64: 1, 32>}, {transform_indices = @transform_5, window_bounds = array<i64: 16, 32>}]} {
    %c0 = arith.constant 0 : index
    %c0_0 = arith.constant 0 : index
    %0 = vector.load %arg1[%c0, %c0_0] : memref<16x32xf32, #tpu.memory_space<vmem>>, vector<16x32xf32>
    %c0_1 = arith.constant 0 : index
    %c0_2 = arith.constant 0 : index
    %c0_3 = arith.constant 0 : index
    %1 = vector.load %arg2[%c0_1, %c0_2, %c0_3] : memref<16x8x32xf32, #tpu.memory_space<vmem>>, vector<16x8x32xf32>
    %c0_4 = arith.constant 0 : index
    %c0_5 = arith.constant 0 : index
    %2 = vector.load %arg3[%c0_4, %c0_5] : memref<16x8xf32, #tpu.memory_space<vmem>>, vector<16x8xf32>
    %c0_6 = arith.constant 0 : index
    %c0_7 = arith.constant 0 : index
    %3 = vector.load %arg4[%c0_6, %c0_7] : memref<1x32xf32, #tpu.memory_space<vmem>>, vector<1x32xf32>
    %c0_8 = arith.constant 0 : index
    %c0_9 = arith.constant 0 : index
    %4 = vector.load %arg5[%c0_8, %c0_9] : memref<1x32xf32, #tpu.memory_space<vmem>>, vector<1x32xf32>
    %5 = vector.broadcast %3 : vector<1x32xf32> to vector<16x32xf32>
    %6 = arith.mulf %0, %5 : vector<16x32xf32>
    %cst = arith.constant dense<0.000000e+00> : vector<16xf32>
    %7 = vector.multi_reduction <add>, %6, %cst [1] : vector<16x32xf32> to vector<16xf32>
    %8 = vector.shape_cast %7 : vector<16xf32> to vector<16x1xf32>
    %9 = vector.shape_cast %4 : vector<1x32xf32> to vector<1x1x32xf32>
    %10 = vector.broadcast %9 : vector<1x1x32xf32> to vector<16x8x32xf32>
    %11 = arith.mulf %1, %10 : vector<16x8x32xf32>
    %cst_10 = arith.constant dense<0.000000e+00> : vector<16x8xf32>
    %12 = vector.multi_reduction <add>, %11, %cst_10 [2] : vector<16x8x32xf32> to vector<16x8xf32>
    %13 = vector.broadcast %8 : vector<16x1xf32> to vector<16x8xf32>
    %14 = arith.addf %13, %12 : vector<16x8xf32>
    %cst_11 = arith.constant 0.000000e+00 : f32
    %15 = vector.broadcast %cst_11 : f32 to vector<16x8xf32>
    %16 = arith.cmpf ogt, %14, %15 : vector<16x8xf32>
    %cst_12 = arith.constant 2.000000e-01 : f32
    %17 = vector.broadcast %cst_12 : f32 to vector<16x8xf32>
    %18 = arith.mulf %17, %14 : vector<16x8xf32>
    %19 = arith.select %16, %14, %18 : vector<16x8xi1>, vector<16x8xf32>
    %cst_13 = arith.constant 0.000000e+00 : f32
    %20 = vector.broadcast %cst_13 : f32 to vector<16x8xf32>
    %21 = arith.cmpf ogt, %2, %20 : vector<16x8xf32>
    %cst_14 = arith.constant -9.000000e+15 : f32
    %22 = vector.broadcast %cst_14 : f32 to vector<16x8xf32>
    %23 = arith.select %21, %19, %22 : vector<16x8xi1>, vector<16x8xf32>
    %cst_15 = arith.constant dense<0xFF800000> : vector<16xf32>
    %24 = vector.multi_reduction <maximumf>, %23, %cst_15 [1] : vector<16x8xf32> to vector<16xf32>
    %25 = vector.shape_cast %24 : vector<16xf32> to vector<16x1xf32>
    %26 = vector.broadcast %25 : vector<16x1xf32> to vector<16x8xf32>
    %27 = arith.subf %23, %26 : vector<16x8xf32>
    %28 = math.exp %27 : vector<16x8xf32>
    %cst_16 = arith.constant dense<0.000000e+00> : vector<16xf32>
    %29 = vector.multi_reduction <add>, %28, %cst_16 [1] : vector<16x8xf32> to vector<16xf32>
    %30 = vector.shape_cast %29 : vector<16xf32> to vector<16x1xf32>
    %31 = vector.broadcast %30 : vector<16x1xf32> to vector<16x8xf32>
    %32 = arith.divf %28, %31 : vector<16x8xf32>
    %33 = vector.shape_cast %32 : vector<16x8xf32> to vector<16x8x1xf32>
    %34 = vector.broadcast %33 : vector<16x8x1xf32> to vector<16x8x32xf32>
    %35 = arith.mulf %34, %1 : vector<16x8x32xf32>
    %cst_17 = arith.constant dense<0.000000e+00> : vector<16x32xf32>
    %36 = vector.multi_reduction <add>, %35, %cst_17 [1] : vector<16x8x32xf32> to vector<16x32xf32>
    %37 = arith.addf %36, %0 : vector<16x32xf32>
    %c0_18 = arith.constant 0 : index
    %c0_19 = arith.constant 0 : index
    %38 = vector.load %arg6[%c0_18, %c0_19] : memref<16x32xf32, #tpu.memory_space<vmem>>, vector<16x32xf32>
    tpu.vector_store %arg6[%c0_18, %c0_19], %37 {strides = array<i32>} : memref<16x32xf32, #tpu.memory_space<vmem>>, vector<16x32xf32>,
    return
  }
  func.func @transform_0(%arg0: i32) -> (i32, i32) {
    %c0_i32 = arith.constant 0 : i32
    %c0_i32_0 = arith.constant 0 : i32
    return %arg0, %c0_i32 : i32, i32
  }
  func.func @transform_1(%arg0: i32) -> (i32, i32, i32) {
    %c0_i32 = arith.constant 0 : i32
    %c0_i32_0 = arith.constant 0 : i32
    %c0_i32_1 = arith.constant 0 : i32
    return %arg0, %c0_i32, %c0_i32_0 : i32, i32, i32
  }
  func.func @transform_2(%arg0: i32) -> (i32, i32) {
    %c0_i32 = arith.constant 0 : i32
    %c0_i32_0 = arith.constant 0 : i32
    return %arg0, %c0_i32 : i32, i32
  }
  func.func @transform_3(%arg0: i32) -> (i32, i32) {
    %c0_i32 = arith.constant 0 : i32
    %c0_i32_0 = arith.constant 0 : i32
    %c0_i32_1 = arith.constant 0 : i32
    return %c0_i32, %c0_i32_0 : i32, i32
  }
  func.func @transform_4(%arg0: i32) -> (i32, i32) {
    %c0_i32 = arith.constant 0 : i32
    %c0_i32_0 = arith.constant 0 : i32
    %c0_i32_1 = arith.constant 0 : i32
    return %c0_i32, %c0_i32_0 : i32, i32
  }
  func.func @transform_5(%arg0: i32) -> (i32, i32) {
    %c0_i32 = arith.constant 0 : i32
    %c0_i32_0 = arith.constant 0 : i32
    return %arg0, %c0_i32 : i32, i32
  }
}

</mosaic_0001>

<llo_original>
// kernel: tpu_custom_call.1
$region0: #{tpu_custom_call.1}
  #allocation0 [shape = 'u32[]', space=smem, size = 0x4, offset = 0x4, fixed_abs, tag = 'smem constant byte address 0x4 - core index']
  #allocation1 [shape = 'u32[144,128]{1,0:T(1,128)}', space=vmem, size = 0x12000, scoped, tag = 'internal scratch']
  %s0 = inlined_call_operand.vmem [shape: f32[64,32], index: 0, kind: input, shape index: {}]
  %s1 = inlined_call_operand.vmem [shape: f32[64,8,32], index: 1, kind: input, shape index: {}]
  %s2 = inlined_call_operand.vmem [shape: f32[64,8], index: 2, kind: input, shape index: {}]
  %s3 = inlined_call_operand.vmem [shape: f32[1,32], index: 3, kind: input, shape index: {}]
  %s4 = inlined_call_operand.vmem [shape: f32[1,32], index: 4, kind: input, shape index: {}]
  %s5 = inlined_call_operand.vmem [shape: f32[64,32], index: 5, kind: output, shape index: {}]
  %s6 = sld [smem:[#allocation0]]
  $region53: #{tpu_custom_call.1} parent=0
    _
  %s8 = ssub.s32 1, %s6
  %s9 = scalar_select 0, %s8, %s6
  loop: start=0, step=1, limit=6
  $region2: #{tpu_custom_call.1} parent=0 // loop_pre_header
    _
  $region3: #{tpu_custom_call.1} parent=0 // loop_header
    %s11 = sphi 0, %s15
    %p12 = scmp.ge.s32.totalorder %s11, 6
    %s21 = sphi 0, %s23
    %s24 = sphi 0, %s21
    %s25 = sphi 0, %s24
    %s41 = sphi 0, %s25
    %s47 = sphi 0, %s49
    %s50 = sphi 0, %s47
    %s51 = sphi 0, %s50
    %s67 = sphi 0, %s51
    %s73 = sphi 0, %s75
    %s76 = sphi 0, %s73
    %s77 = sphi 0, %s76
    %s93 = sphi 0, %s77
    %s97 = sphi 0, %s97
    %s99 = sphi 0, %s97
    %s100 = sphi 0, %s99
    %s114 = sphi 0, %s100
    %s118 = sphi 0, %s118
    %s120 = sphi 0, %s118
    %s121 = sphi 0, %s120
    %s135 = sphi 0, %s121
    %s141 = sphi 0, %s143
    %s144 = sphi 0, %s141
    %s145 = sphi 0, %s144
    %s161 = sphi 0, %s145
  $region4: #{tpu_custom_call.1} parent=0 // loop_header_branch
    %14 = sbr.rel (%p12) target = $region8
  $region5: #{tpu_custom_call.1} parent=0 // loop_body
    %s16 = ssub.s32 %s11, 1
    %s17 = ssub.s32 %s11, 2
    %s18 = sadd.s32 %s11, 1
    %s19 = ssub.s32 %s11, %s18
    %p20 = scmp.eq.s32.totalorder %s19, 0
    %s22 = sadd.s32 %s21, 1
    %s23 = scalar_select %p20, %s21, %s22
    %p26 = pneg %p20
    %p27 = scmp.eq.s32.totalorder %s11, 3
    %p28 = por %p26, %p27
    %p29 = scmp.ne.s32.totalorder %s21, %s24
    %p30 = scmp.eq.s32.totalorder %s11, 0
    %p31 = por %p29, %p30
    %p32 = scmp.ne.s32.totalorder %s21, %s24
    %p33 = scmp.eq.s32.totalorder %s16, 3
    %p34 = por %p32, %p33
    %p35 = scmp.ne.s32.totalorder %s24, %s25
    %p36 = scmp.eq.s32.totalorder %s16, 0
    %p37 = por %p35, %p36
    %p38 = scmp.ne.s32.totalorder %s24, %s25
    %p39 = scmp.eq.s32.totalorder %s17, 3
    %p40 = por %p38, %p39
    %p42 = scmp.ne.s32.totalorder %s25, %s41
    %p43 = scmp.eq.s32.totalorder %s17, 0
    %p44 = por %p42, %p43
    %s45 = ssub.s32 %s11, %s18
    %p46 = scmp.eq.s32.totalorder %s45, 0
    %s48 = sadd.s32 %s47, 1
    %s49 = scalar_select %p46, %s47, %s48
    %p52 = pneg %p46
    %p53 = scmp.eq.s32.totalorder %s11, 3
    %p54 = por %p52, %p53
    %p55 = scmp.ne.s32.totalorder %s47, %s50
    %p56 = scmp.eq.s32.totalorder %s11, 0
    %p57 = por %p55, %p56
    %p58 = scmp.ne.s32.totalorder %s47, %s50
    %p59 = scmp.eq.s32.totalorder %s16, 3
    %p60 = por %p58, %p59
    %p61 = scmp.ne.s32.totalorder %s50, %s51
    %p62 = scmp.eq.s32.totalorder %s16, 0
    %p63 = por %p61, %p62
    %p64 = scmp.ne.s32.totalorder %s50, %s51
    %p65 = scmp.eq.s32.totalorder %s17, 3
    %p66 = por %p64, %p65
    %p68 = scmp.ne.s32.totalorder %s51, %s67
    %p69 = scmp.eq.s32.totalorder %s17, 0
    %p70 = por %p68, %p69
    %s71 = ssub.s32 %s11, %s18
    %p72 = scmp.eq.s32.totalorder %s71, 0
    %s74 = sadd.s32 %s73, 1
    %s75 = scalar_select %p72, %s73, %s74
    %p78 = pneg %p72
    %p79 = scmp.eq.s32.totalorder %s11, 3
    %p80 = por %p78, %p79
    %p81 = scmp.ne.s32.totalorder %s73, %s76
    %p82 = scmp.eq.s32.totalorder %s11, 0
    %p83 = por %p81, %p82
    %p84 = scmp.ne.s32.totalorder %s73, %s76
    %p85 = scmp.eq.s32.totalorder %s16, 3
    %p86 = por %p84, %p85
    %p87 = scmp.ne.s32.totalorder %s76, %s77
    %p88 = scmp.eq.s32.totalorder %s16, 0
    %p89 = por %p87, %p88
    %p90 = scmp.ne.s32.totalorder %s76, %s77
    %p91 = scmp.eq.s32.totalorder %s17, 3
    %p92 = por %p90, %p91
    %p94 = scmp.ne.s32.totalorder %s77, %s93
    %p95 = scmp.eq.s32.totalorder %s17, 0
    %p96 = por %p94, %p95
    %s98 = sadd.s32 %s97, 1
    %p101 = scmp.eq.s32.totalorder %s11, 3
    %p102 = scmp.ne.s32.totalorder %s97, %s99
    %p103 = scmp.eq.s32.totalorder %s11, 0
    %p104 = por %p102, %p103
    %p105 = scmp.ne.s32.totalorder %s97, %s99
    %p106 = scmp.eq.s32.totalorder %s16, 3
    %p107 = por %p105, %p106
    %p108 = scmp.ne.s32.totalorder %s99, %s100
    %p109 = scmp.eq.s32.totalorder %s16, 0
    %p110 = por %p108, %p109
    %p111 = scmp.ne.s32.totalorder %s99, %s100
    %p112 = scmp.eq.s32.totalorder %s17, 3
    %p113 = por %p111, %p112
    %p115 = scmp.ne.s32.totalorder %s100, %s114
    %p116 = scmp.eq.s32.totalorder %s17, 0
    %p117 = por %p115, %p116
    %s119 = sadd.s32 %s118, 1
    %p122 = scmp.eq.s32.totalorder %s11, 3
    %p123 = scmp.ne.s32.totalorder %s118, %s120
    %p124 = scmp.eq.s32.totalorder %s11, 0
    %p125 = por %p123, %p124
    %p126 = scmp.ne.s32.totalorder %s118, %s120
    %p127 = scmp.eq.s32.totalorder %s16, 3
    %p128 = por %p126, %p127
    %p129 = scmp.ne.s32.totalorder %s120, %s121
    %p130 = scmp.eq.s32.totalorder %s16, 0
    %p131 = por %p129, %p130
    %p132 = scmp.ne.s32.totalorder %s120, %s121
    %p133 = scmp.eq.s32.totalorder %s17, 3
    %p134 = por %p132, %p133
    %p136 = scmp.ne.s32.totalorder %s121, %s135
    %p137 = scmp.eq.s32.totalorder %s17, 0
    %p138 = por %p136, %p137
    %s139 = ssub.s32 %s11, %s18
    %p140 = scmp.eq.s32.totalorder %s139, 0
    %s142 = sadd.s32 %s141, 1
    %s143 = scalar_select %p140, %s141, %s142
    %p146 = pneg %p140
    %p147 = scmp.eq.s32.totalorder %s11, 3
    %p148 = por %p146, %p147
    %p149 = scmp.ne.s32.totalorder %s141, %s144
    %p150 = scmp.eq.s32.totalorder %s11, 0
    %p151 = por %p149, %p150
    %p152 = scmp.ne.s32.totalorder %s141, %s144
    %p153 = scmp.eq.s32.totalorder %s16, 3
    %p154 = por %p152, %p153
    %p155 = scmp.ne.s32.totalorder %s144, %s145
    %p156 = scmp.eq.s32.totalorder %s16, 0
    %p157 = por %p155, %p156
    %p158 = scmp.ne.s32.totalorder %s144, %s145
    %p159 = scmp.eq.s32.totalorder %s17, 3
    %p160 = por %p158, %p159
    %p162 = scmp.ne.s32.totalorder %s145, %s161
    %p163 = scmp.eq.s32.totalorder %s17, 0
    %p164 = por %p162, %p163
    %p165 = scmp.le.s32.totalorder 1, %s11
    %p166 = scmp.lt.s32.totalorder %s11, 5
    %p167 = pnand %p165, %p166
    %p168 = pneg %p167
    // Predicated region
    $region9: #{tpu_custom_call.1} parent=5 // pred_check
      _
    $region10: #{tpu_custom_call.1} parent=5 // pred_check_branch
      %170 = sbr.rel (%p167) target = $region12
    $region11: #{tpu_custom_call.1} parent=5 // pred_region
      %s171 = ssub.s32 %s11, 1
      // Predicated region
      $region13: #{tpu_custom_call.1} parent=11 // pred_check
        %p172 = pneg %p110
      $region14: #{tpu_custom_call.1} parent=11 // pred_check_branch
        %174 = sbr.rel (%p172) target = $region16
      $region15: #{tpu_custom_call.1} parent=11 // pred_region
        _
      $region16: #{tpu_custom_call.1} parent=11 // pred_fallthru
        _
      // Predicated region
      $region17: #{tpu_custom_call.1} parent=11 // pred_check
        %p175 = pneg %p131
      $region18: #{tpu_custom_call.1} parent=11 // pred_check_branch
        %177 = sbr.rel (%p175) target = $region20
      $region19: #{tpu_custom_call.1} parent=11 // pred_region
        _
      $region20: #{tpu_custom_call.1} parent=11 // pred_fallthru
        _
    $region12: #{tpu_custom_call.1} parent=5 // pred_fallthru
      _
    %p178 = scmp.lt.s32.totalorder %s11, 4
    // Predicated region
    $region21: #{tpu_custom_call.1} parent=5 // pred_check
      %p179 = pneg %p178
    $region22: #{tpu_custom_call.1} parent=5 // pred_check_branch
      %181 = sbr.rel (%p179) target = $region24
    $region23: #{tpu_custom_call.1} parent=5 // pred_region
      // Predicated region
      $region25: #{tpu_custom_call.1} parent=23 // pred_check
        %p182 = pneg %p31
      $region26: #{tpu_custom_call.1} parent=23 // pred_check_branch
        %184 = sbr.rel (%p182) target = $region28
      $region27: #{tpu_custom_call.1} parent=23 // pred_region
        %s185 = smul.u32 2, %s11
        %p186 = scmp.lt.s32.totalorder %s185, 7
        %s187 = scalar_select %p186, %s185, 7
        %s188 = smul.addr %s187, 8
        %s189 = scalar_lea.vmem %s0, %s188
        %s190 = smul.u32 2, %s11
      $region28: #{tpu_custom_call.1} parent=23 // pred_fallthru
        _
      // Predicated region
      $region29: #{tpu_custom_call.1} parent=23 // pred_check
        %p191 = pneg %p57
      $region30: #{tpu_custom_call.1} parent=23 // pred_check_branch
        %193 = sbr.rel (%p191) target = $region32
      $region31: #{tpu_custom_call.1} parent=23 // pred_region
        %s194 = smul.u32 16, %s11
        %p195 = scmp.lt.s32.totalorder %s194, 63
        %s196 = scalar_select %p195, %s194, 63
        %s197 = smul.addr %s196, 8
        %s198 = scalar_lea.vmem %s1, %s197
        %s199 = smul.u32 16, %s11
      $region32: #{tpu_custom_call.1} parent=23 // pred_fallthru
        _
      // Predicated region
      $region33: #{tpu_custom_call.1} parent=23 // pred_check
        %p200 = pneg %p83
      $region34: #{tpu_custom_call.1} parent=23 // pred_check_branch
        %202 = sbr.rel (%p200) target = $region36
      $region35: #{tpu_custom_call.1} parent=23 // pred_region
        %s203 = smul.u32 2, %s11
        %p204 = scmp.lt.s32.totalorder %s203, 7
        %s205 = scalar_select %p204, %s203, 7
        %s206 = smul.addr %s205, 8
        %s207 = scalar_lea.vmem %s2, %s206
        %s208 = smul.u32 2, %s11
      $region36: #{tpu_custom_call.1} parent=23 // pred_fallthru
        _
    $region24: #{tpu_custom_call.1} parent=5 // pred_fallthru
      _
    %p209 = scmp.le.s32.totalorder 1, %s11
    %p210 = scmp.lt.s32.totalorder %s11, 5
    %p211 = pnand %p209, %p210
    %p212 = pneg %p211
    // Predicated region
    $region37: #{tpu_custom_call.1} parent=5 // pred_check
      _
    $region38: #{tpu_custom_call.1} parent=5 // pred_check_branch
      %214 = sbr.rel (%p211) target = $region40
    $region39: #{tpu_custom_call.1} parent=5 // pred_region
      %s215 = ssub.s32 %s11, 1
      %s216 = smul.u32 2, %s16
      %p217 = scmp.lt.s32.totalorder %s216, 7
      %s218 = scalar_select %p217, %s216, 7
      %s219 = smul.addr %s218, 8
      %s220 = scalar_lea.vmem %s0, %s219
      %p221 = pneg %p37
      %p222 = pneg %p34
      %s223 = smul.u32 16, %s16
      %p224 = scmp.lt.s32.totalorder %s223, 63
      %s225 = scalar_select %p224, %s223, 63
      %s226 = smul.addr %s225, 8
      %s227 = scalar_lea.vmem %s1, %s226
      %p228 = pneg %p63
      %p229 = pneg %p60
      %s230 = smul.u32 2, %s16
      %p231 = scmp.lt.s32.totalorder %s230, 7
      %s232 = scalar_select %p231, %s230, 7
      %s233 = smul.addr %s232, 8
      %s234 = scalar_lea.vmem %s2, %s233
      %p235 = pneg %p89
      %p236 = pneg %p86
      %p237 = pneg %p110
      %p238 = pneg %p107
      %p239 = pneg %p131
      %p240 = pneg %p128
      %p241 = pneg %p157
      %p242 = pneg %p154
      %s243 = smul.u32 2, %s16
      %p244 = scmp.lt.s32.totalorder %s243, 7
      %s245 = scalar_select %p244, %s243, 7
      %s246 = smul.addr %s245, 8
      %s247 = scalar_lea.vmem %s5, %s246
      %s248 = smul.u32 2, %s16
      %p249 = scmp.lt.s32.totalorder %s248, 7
      %s250 = scalar_select %p249, %s248, 7
      %s251 = smul.addr %s250, 8
      %s252 = scalar_lea.vmem %s0, %s251
      %s253 = smul.u32 2, %s16
      %s254 = smul.u32 16, %s16
      %p255 = scmp.lt.s32.totalorder %s254, 63
      %s256 = scalar_select %p255, %s254, 63
      %s257 = smul.addr %s256, 8
      %s258 = scalar_lea.vmem %s1, %s257
      %s259 = smul.u32 16, %s16
      %s260 = smul.u32 2, %s16
      %p261 = scmp.lt.s32.totalorder %s260, 7
      %s262 = scalar_select %p261, %s260, 7
      %s263 = smul.addr %s262, 8
      %s264 = scalar_lea.vmem %s2, %s263
      %s265 = smul.u32 2, %s16
      %s266 = smul.u32 2, %s16
      %p267 = scmp.lt.s32.totalorder %s266, 7
      %s268 = scalar_select %p267, %s266, 7
      %s269 = smul.addr %s268, 8
      %s270 = scalar_lea.vmem %s5, %s269
      %s271 = smul.u32 2, %s16
      %v272 = vld [vmem:[%s252] sm:$0xff]
      %v273 = vld [vmem:[%s252 + $0x8] sm:$0xff]
      %v274 = vld [vmem:[%s258] sm:$0xff]
      %v275 = vld [vmem:[%s258 + $0x8] sm:$0xff]
      %v276 = vld [vmem:[%s258 + $0x10] sm:$0xff]
      %v277 = vld [vmem:[%s258 + $0x18] sm:$0xff]
      %v278 = vld [vmem:[%s258 + $0x20] sm:$0xff]
      %v279 = vld [vmem:[%s258 + $0x28] sm:$0xff]
      %v280 = vld [vmem:[%s258 + $0x30] sm:$0xff]
      %v281 = vld [vmem:[%s258 + $0x38] sm:$0xff]
      %v282 = vld [vmem:[%s258 + $0x40] sm:$0xff]
      %v283 = vld [vmem:[%s258 + $0x48] sm:$0xff]
      %v284 = vld [vmem:[%s258 + $0x50] sm:$0xff]
      %v285 = vld [vmem:[%s258 + $0x58] sm:$0xff]
      %v286 = vld [vmem:[%s258 + $0x60] sm:$0xff]
      %v287 = vld [vmem:[%s258 + $0x68] sm:$0xff]
      %v288 = vld [vmem:[%s258 + $0x70] sm:$0xff]
      %v289 = vld [vmem:[%s258 + $0x78] sm:$0xff]
      %v290 = vld [vmem:[%s264] sm:$0xff]
      %v291 = vld [vmem:[%s264 + $0x8] sm:$0xff]
      %v292 = vld [vmem:[%s3] sm:$0x1]
      %v293 = vld [vmem:[%s4] sm:$0x1]
      %v295 = vlaneseq
      %v296 = vshrl.u32 %v295, 7
      %v297 = vsub.s32 0, %v296
      %v298 = vrot.slane %v292, %v297
      %v300 = vmul.f32 %v272, %v298
      %v301 = vmul.f32 %v273, %v298
      %vm302 = vcmask 261120
      %v303 = vsel %vm302, %v300, 0.0
      %304 = vadd.xlane.f32.xlu0 %v303
      %v305 = vpop.xlane.xlu0 %304
      %v306 = vsel %vm302, %v301, 0.0
      %307 = vadd.xlane.f32.xlu0 %v306
      %v308 = vpop.xlane.xlu0 %307
      %v310 = vlaneseq
      %v311 = vshrl.u32 %v310, 7
      %v312 = vsub.s32 0, %v311
      %v313 = vrot.slane %v293, %v312
      %v315 = vmul.f32 %v274, %v313
      %v316 = vmul.f32 %v275, %v313
      %v317 = vmul.f32 %v276, %v313
      %v318 = vmul.f32 %v277, %v313
      %v319 = vmul.f32 %v278, %v313
      %v320 = vmul.f32 %v279, %v313
      %v321 = vmul.f32 %v280, %v313
      %v322 = vmul.f32 %v281, %v313
      %v323 = vmul.f32 %v282, %v313
      %v324 = vmul.f32 %v283, %v313
      %v325 = vmul.f32 %v284, %v313
      %v326 = vmul.f32 %v285, %v313
      %v327 = vmul.f32 %v286, %v313
      %v328 = vmul.f32 %v287, %v313
      %v329 = vmul.f32 %v288, %v313
      %v330 = vmul.f32 %v289, %v313
      %v331 = vsel %vm302, %v315, 0.0
      %332 = vadd.xlane.f32.xlu0 %v331
      %v333 = vpop.xlane.xlu0 %332
      %v334 = vsel %vm302, %v316, 0.0
      %335 = vadd.xlane.f32.xlu0 %v334
      %v336 = vpop.xlane.xlu0 %335
      %v337 = vsel %vm302, %v317, 0.0
      %338 = vadd.xlane.f32.xlu0 %v337
      %v339 = vpop.xlane.xlu0 %338
      %v340 = vsel %vm302, %v318, 0.0
      %341 = vadd.xlane.f32.xlu0 %v340
      %v342 = vpop.xlane.xlu0 %341
      %v343 = vsel %vm302, %v319, 0.0
      %344 = vadd.xlane.f32.xlu0 %v343
      %v345 = vpop.xlane.xlu0 %344
      %v346 = vsel %vm302, %v320, 0.0
      %347 = vadd.xlane.f32.xlu0 %v346
      %v348 = vpop.xlane.xlu0 %347
      %v349 = vsel %vm302, %v321, 0.0
      %350 = vadd.xlane.f32.xlu0 %v349
      %v351 = vpop.xlane.xlu0 %350
      %v352 = vsel %vm302, %v322, 0.0
      %353 = vadd.xlane.f32.xlu0 %v352
      %v354 = vpop.xlane.xlu0 %353
      %v355 = vsel %vm302, %v323, 0.0
      %356 = vadd.xlane.f32.xlu0 %v355
      %v357 = vpop.xlane.xlu0 %356
      %v358 = vsel %vm302, %v324, 0.0
      %359 = vadd.xlane.f32.xlu0 %v358
      %v360 = vpop.xlane.xlu0 %359
      %v361 = vsel %vm302, %v325, 0.0
      %362 = vadd.xlane.f32.xlu0 %v361
      %v363 = vpop.xlane.xlu0 %362
      %v364 = vsel %vm302, %v326, 0.0
      %365 = vadd.xlane.f32.xlu0 %v364
      %v366 = vpop.xlane.xlu0 %365
      %v367 = vsel %vm302, %v327, 0.0
      %368 = vadd.xlane.f32.xlu0 %v367
      %v369 = vpop.xlane.xlu0 %368
      %v370 = vsel %vm302, %v328, 0.0
      %371 = vadd.xlane.f32.xlu0 %v370
      %v372 = vpop.xlane.xlu0 %371
      %v373 = vsel %vm302, %v329, 0.0
      %374 = vadd.xlane.f32.xlu0 %v373
      %v375 = vpop.xlane.xlu0 %374
      %v376 = vsel %vm302, %v330, 0.0
      %377 = vadd.xlane.f32.xlu0 %v376
      %v378 = vpop.xlane.xlu0 %377
      %v395 = vlaneseq
      %v396 = vand.u32 %v395, 127
      %v397 = vlaneseq
      %v398 = vshrl.u32 %v397, 7
      %v399 = vsub.s32 %v396, %v398
      %v400 = vrot.slane %v333, %v399
      %v401 = vlaneseq
      %v402 = vshrl.u32 %v401, 7
      %v403 = vsub.s32 %v396, %v402
      %v404 = vrot.slane %v336, %v403
      %v405 = vlaneseq
      %v406 = vshrl.u32 %v405, 7
      %v407 = vsub.s32 %v396, %v406
      %v408 = vrot.slane %v339, %v407
      %v409 = vlaneseq
      %v410 = vshrl.u32 %v409, 7
      %v411 = vsub.s32 %v396, %v410
      %v412 = vrot.slane %v342, %v411
      %v413 = vlaneseq
      %v414 = vshrl.u32 %v413, 7
      %v415 = vsub.s32 %v396, %v414
      %v416 = vrot.slane %v345, %v415
      %v417 = vlaneseq
      %v418 = vshrl.u32 %v417, 7
      %v419 = vsub.s32 %v396, %v418
      %v420 = vrot.slane %v348, %v419
      %v421 = vlaneseq
      %v422 = vshrl.u32 %v421, 7
      %v423 = vsub.s32 %v396, %v422
      %v424 = vrot.slane %v351, %v423
      %v425 = vlaneseq
      %v426 = vshrl.u32 %v425, 7
      %v427 = vsub.s32 %v396, %v426
      %v428 = vrot.slane %v354, %v427
      %v429 = vlaneseq
      %v430 = vshrl.u32 %v429, 7
      %v431 = vsub.s32 %v396, %v430
      %v432 = vrot.slane %v357, %v431
      %v433 = vlaneseq
      %v434 = vshrl.u32 %v433, 7
      %v435 = vsub.s32 %v396, %v434
      %v436 = vrot.slane %v360, %v435
      %v437 = vlaneseq
      %v438 = vshrl.u32 %v437, 7
      %v439 = vsub.s32 %v396, %v438
      %v440 = vrot.slane %v363, %v439
      %v441 = vlaneseq
      %v442 = vshrl.u32 %v441, 7
      %v443 = vsub.s32 %v396, %v442
      %v444 = vrot.slane %v366, %v443
      %v445 = vlaneseq
      %v446 = vshrl.u32 %v445, 7
      %v447 = vsub.s32 %v396, %v446
      %v448 = vrot.slane %v369, %v447
      %v449 = vlaneseq
      %v450 = vshrl.u32 %v449, 7
      %v451 = vsub.s32 %v396, %v450
      %v452 = vrot.slane %v372, %v451
      %v453 = vlaneseq
      %v454 = vshrl.u32 %v453, 7
      %v455 = vsub.s32 %v396, %v454
      %v456 = vrot.slane %v375, %v455
      %v457 = vlaneseq
      %v458 = vshrl.u32 %v457, 7
      %v459 = vsub.s32 %v396, %v458
      %v460 = vrot.slane %v378, %v459
      %vm461 = vcmask 1041409
      %v462 = vsel %vm461, %v404, %v400
      %vm463 = vcmask 1042434
      %v464 = vsel %vm463, %v408, %v462
      %vm465 = vcmask 1043459
      %v466 = vsel %vm465, %v412, %v464
      %vm467 = vcmask 1044484
      %v468 = vsel %vm467, %v416, %v466
      %vm469 = vcmask 1045509
      %v470 = vsel %vm469, %v420, %v468
      %vm471 = vcmask 1046534
      %v472 = vsel %vm471, %v424, %v470
      %vm473 = vcmask 1047559
      %v474 = vsel %vm473, %v428, %v472
      %v475 = vsel %vm461, %v436, %v432
      %v476 = vsel %vm463, %v440, %v475
      %v477 = vsel %vm465, %v444, %v476
      %v478 = vsel %vm467, %v448, %v477
      %v479 = vsel %vm469, %v452, %v478
      %v480 = vsel %vm471, %v456, %v479
      %v481 = vsel %vm473, %v460, %v480
      %v484 = vadd.f32 %v305, %v474
      %v485 = vadd.f32 %v308, %v481
      %vm486 = vcmp.gt.f32.partialorder %v484, 0.0
      %vm487 = vcmp.gt.f32.partialorder %v485, 0.0
      %v488 = vmul.f32 %v484, 0.2
      %v489 = vmul.f32 %v485, 0.2
      %v490 = vsel %vm486, %v484, %v488
      %v491 = vsel %vm487, %v485, %v489
      %vm492 = vcmp.gt.f32.partialorder %v290, 0.0
      %vm493 = vcmp.gt.f32.partialorder %v291, 0.0
      %v494 = vsel %vm492, %v490, -9e+15
      %v495 = vsel %vm493, %v491, -9e+15
      %vm496 = vcmask 64512
      %v497 = vsel %vm496, %v494, -inf
      %498 = vmax.xlane.f32.xlu0 %v497
      %v499 = vpop.xlane.xlu0 %498
      %v500 = vsel %vm496, %v495, -inf
      %501 = vmax.xlane.f32.xlu0 %v500
      %v502 = vpop.xlane.xlu0 %501
      %v503 = vsub.f32 %v494, %v499
      %v504 = vsub.f32 %v495, %v502
      %v505 = vmul.f32 %v503, 1.442695
      %v506 = vpow.pop %v505
      %v507 = vmul.f32 %v504, 1.442695
      %v508 = vpow.pop %v507
      %v509 = vsel %vm496, %v506, 0.0
      %510 = vadd.xlane.f32.xlu0 %v509
      %v511 = vpop.xlane.xlu0 %510
      %v512 = vsel %vm496, %v508, 0.0
      %513 = vadd.xlane.f32.xlu0 %v512
      %v514 = vpop.xlane.xlu0 %513
      %v515 = vrcp.pop %v511
      %v516 = vmul.f32 %v506, %v515
      %v517 = vrcp.pop %v514
      %v518 = vmul.f32 %v508, %v517
      %v519 = vlaneseq
      %v520 = vshrl.u32 %v519, 7
      %v521 = vsub.s32 0, %v520
      %v522 = vrot.slane %v516, %v521
      %524 = vbcast.lane.b32.xlu0 %v522, 256
      %v525 = vpop.permute.xlu0 %524
      %v526 = vlaneseq
      %v527 = vshrl.u32 %v526, 7
      %v528 = vsub.s32 1, %v527
      %v529 = vrot.slane %v516, %v528
      %531 = vbcast.lane.b32.xlu0 %v529, 256
      %v532 = vpop.permute.xlu0 %531
      %v533 = vlaneseq
      %v534 = vshrl.u32 %v533, 7
      %v535 = vsub.s32 2, %v534
      %v536 = vrot.slane %v516, %v535
      %538 = vbcast.lane.b32.xlu0 %v536, 256
      %v539 = vpop.permute.xlu0 %538
      %v540 = vlaneseq
      %v541 = vshrl.u32 %v540, 7
      %v542 = vsub.s32 3, %v541
      %v543 = vrot.slane %v516, %v542
      %545 = vbcast.lane.b32.xlu0 %v543, 256
      %v546 = vpop.permute.xlu0 %545
      %v547 = vlaneseq
      %v548 = vshrl.u32 %v547, 7
      %v549 = vsub.s32 4, %v548
      %v550 = vrot.slane %v516, %v549
      %552 = vbcast.lane.b32.xlu0 %v550, 256
      %v553 = vpop.permute.xlu0 %552
      %v554 = vlaneseq
      %v555 = vshrl.u32 %v554, 7
      %v556 = vsub.s32 5, %v555
      %v557 = vrot.slane %v516, %v556
      %559 = vbcast.lane.b32.xlu0 %v557, 256
      %v560 = vpop.permute.xlu0 %559
      %v561 = vlaneseq
      %v562 = vshrl.u32 %v561, 7
      %v563 = vsub.s32 6, %v562
      %v564 = vrot.slane %v516, %v563
      %566 = vbcast.lane.b32.xlu0 %v564, 256
      %v567 = vpop.permute.xlu0 %566
      %v568 = vlaneseq
      %v569 = vshrl.u32 %v568, 7
      %v570 = vsub.s32 7, %v569
      %v571 = vrot.slane %v516, %v570
      %573 = vbcast.lane.b32.xlu0 %v571, 256
      %v574 = vpop.permute.xlu0 %573
      %v575 = vlaneseq
      %v576 = vshrl.u32 %v575, 7
      %v577 = vsub.s32 0, %v576
      %v578 = vrot.slane %v518, %v577
      %580 = vbcast.lane.b32.xlu0 %v578, 256
      %v581 = vpop.permute.xlu0 %580
      %v582 = vlaneseq
      %v583 = vshrl.u32 %v582, 7
      %v584 = vsub.s32 1, %v583
      %v585 = vrot.slane %v518, %v584
      %587 = vbcast.lane.b32.xlu0 %v585, 256
      %v588 = vpop.permute.xlu0 %587
      %v589 = vlaneseq
      %v590 = vshrl.u32 %v589, 7
      %v591 = vsub.s32 2, %v590
      %v592 = vrot.slane %v518, %v591
      %594 = vbcast.lane.b32.xlu0 %v592, 256
      %v595 = vpop.permute.xlu0 %594
      %v596 = vlaneseq
      %v597 = vshrl.u32 %v596, 7
      %v598 = vsub.s32 3, %v597
      %v599 = vrot.slane %v518, %v598
      %601 = vbcast.lane.b32.xlu0 %v599, 256
      %v602 = vpop.permute.xlu0 %601
      %v603 = vlaneseq
      %v604 = vshrl.u32 %v603, 7
      %v605 = vsub.s32 4, %v604
      %v606 = vrot.slane %v518, %v605
      %608 = vbcast.lane.b32.xlu0 %v606, 256
      %v609 = vpop.permute.xlu0 %608
      %v610 = vlaneseq
      %v611 = vshrl.u32 %v610, 7
      %v612 = vsub.s32 5, %v611
      %v613 = vrot.slane %v518, %v612
      %615 = vbcast.lane.b32.xlu0 %v613, 256
      %v616 = vpop.permute.xlu0 %615
      %v617 = vlaneseq
      %v618 = vshrl.u32 %v617, 7
      %v619 = vsub.s32 6, %v618
      %v620 = vrot.slane %v518, %v619
      %622 = vbcast.lane.b32.xlu0 %v620, 256
      %v623 = vpop.permute.xlu0 %622
      %v624 = vlaneseq
      %v625 = vshrl.u32 %v624, 7
      %v626 = vsub.s32 7, %v625
      %v627 = vrot.slane %v518, %v626
      %629 = vbcast.lane.b32.xlu0 %v627, 256
      %v630 = vpop.permute.xlu0 %629
      %v631 = vmul.f32 %v525, %v274
      %v632 = vmul.f32 %v532, %v275
      %v633 = vmul.f32 %v539, %v276
      %v634 = vmul.f32 %v546, %v277
      %v635 = vmul.f32 %v553, %v278
      %v636 = vmul.f32 %v560, %v279
      %v637 = vmul.f32 %v567, %v280
      %v638 = vmul.f32 %v574, %v281
      %v639 = vmul.f32 %v581, %v282
      %v640 = vmul.f32 %v588, %v283
      %v641 = vmul.f32 %v595, %v284
      %v642 = vmul.f32 %v602, %v285
      %v643 = vmul.f32 %v609, %v286
      %v644 = vmul.f32 %v616, %v287
      %v645 = vmul.f32 %v623, %v288
      %v646 = vmul.f32 %v630, %v289
      %v647 = vsel %vm302, %v631, 0.0
      %v648 = vrot.slane %v647, 4
      %v649 = vadd.f32 %v647, %v648
      %v650 = vrot.slane %v649, 2
      %v651 = vadd.f32 %v649, %v650
      %v652 = vrot.slane %v651, 1
      %v653 = vadd.f32 %v651, %v652
      %v654 = vsel %vm302, %v632, 0.0
      %v655 = vrot.slane %v654, 4
      %v656 = vadd.f32 %v654, %v655
      %v657 = vrot.slane %v656, 2
      %v658 = vadd.f32 %v656, %v657
      %v659 = vrot.slane %v658, 1
      %v660 = vadd.f32 %v658, %v659
      %v661 = vsel %vm302, %v633, 0.0
      %v662 = vrot.slane %v661, 4
      %v663 = vadd.f32 %v661, %v662
      %v664 = vrot.slane %v663, 2
      %v665 = vadd.f32 %v663, %v664
      %v666 = vrot.slane %v665, 1
      %v667 = vadd.f32 %v665, %v666
      %v668 = vsel %vm302, %v634, 0.0
      %v669 = vrot.slane %v668, 4
      %v670 = vadd.f32 %v668, %v669
      %v671 = vrot.slane %v670, 2
      %v672 = vadd.f32 %v670, %v671
      %v673 = vrot.slane %v672, 1
      %v674 = vadd.f32 %v672, %v673
      %v675 = vsel %vm302, %v635, 0.0
      %v676 = vrot.slane %v675, 4
      %v677 = vadd.f32 %v675, %v676
      %v678 = vrot.slane %v677, 2
      %v679 = vadd.f32 %v677, %v678
      %v680 = vrot.slane %v679, 1
      %v681 = vadd.f32 %v679, %v680
      %v682 = vsel %vm302, %v636, 0.0
      %v683 = vrot.slane %v682, 4
      %v684 = vadd.f32 %v682, %v683
      %v685 = vrot.slane %v684, 2
      %v686 = vadd.f32 %v684, %v685
      %v687 = vrot.slane %v686, 1
      %v688 = vadd.f32 %v686, %v687
      %v689 = vsel %vm302, %v637, 0.0
      %v690 = vrot.slane %v689, 4
      %v691 = vadd.f32 %v689, %v690
      %v692 = vrot.slane %v691, 2
      %v693 = vadd.f32 %v691, %v692
      %v694 = vrot.slane %v693, 1
      %v695 = vadd.f32 %v693, %v694
      %v696 = vsel %vm302, %v638, 0.0
      %v697 = vrot.slane %v696, 4
      %v698 = vadd.f32 %v696, %v697
      %v699 = vrot.slane %v698, 2
      %v700 = vadd.f32 %v698, %v699
      %v701 = vrot.slane %v700, 1
      %v702 = vadd.f32 %v700, %v701
      %v703 = vsel %vm302, %v639, 0.0
      %v704 = vrot.slane %v703, 4
      %v705 = vadd.f32 %v703, %v704
      %v706 = vrot.slane %v705, 2
      %v707 = vadd.f32 %v705, %v706
      %v708 = vrot.slane %v707, 1
      %v709 = vadd.f32 %v707, %v708
      %v710 = vsel %vm302, %v640, 0.0
      %v711 = vrot.slane %v710, 4
      %v712 = vadd.f32 %v710, %v711
      %v713 = vrot.slane %v712, 2
      %v714 = vadd.f32 %v712, %v713
      %v715 = vrot.slane %v714, 1
      %v716 = vadd.f32 %v714, %v715
      %v717 = vsel %vm302, %v641, 0.0
      %v718 = vrot.slane %v717, 4
      %v719 = vadd.f32 %v717, %v718
      %v720 = vrot.slane %v719, 2
      %v721 = vadd.f32 %v719, %v720
      %v722 = vrot.slane %v721, 1
      %v723 = vadd.f32 %v721, %v722
      %v724 = vsel %vm302, %v642, 0.0
      %v725 = vrot.slane %v724, 4
      %v726 = vadd.f32 %v724, %v725
      %v727 = vrot.slane %v726, 2
      %v728 = vadd.f32 %v726, %v727
      %v729 = vrot.slane %v728, 1
      %v730 = vadd.f32 %v728, %v729
      %v731 = vsel %vm302, %v643, 0.0
      %v732 = vrot.slane %v731, 4
      %v733 = vadd.f32 %v731, %v732
      %v734 = vrot.slane %v733, 2
      %v735 = vadd.f32 %v733, %v734
      %v736 = vrot.slane %v735, 1
      %v737 = vadd.f32 %v735, %v736
      %v738 = vsel %vm302, %v644, 0.0
      %v739 = vrot.slane %v738, 4
      %v740 = vadd.f32 %v738, %v739
      %v741 = vrot.slane %v740, 2
      %v742 = vadd.f32 %v740, %v741
      %v743 = vrot.slane %v742, 1
      %v744 = vadd.f32 %v742, %v743
      %v745 = vsel %vm302, %v645, 0.0
      %v746 = vrot.slane %v745, 4
      %v747 = vadd.f32 %v745, %v746
      %v748 = vrot.slane %v747, 2
      %v749 = vadd.f32 %v747, %v748
      %v750 = vrot.slane %v749, 1
      %v751 = vadd.f32 %v749, %v750
      %v752 = vsel %vm302, %v646, 0.0
      %v753 = vrot.slane %v752, 4
      %v754 = vadd.f32 %v752, %v753
      %v755 = vrot.slane %v754, 2
      %v756 = vadd.f32 %v754, %v755
      %v757 = vrot.slane %v756, 1
      %v758 = vadd.f32 %v756, %v757
      %v761 = vrot.slane %v272, 1
      %v762 = vrot.slane %v272, 2
      %v763 = vrot.slane %v272, 3
      %v764 = vrot.slane %v272, 4
      %v765 = vrot.slane %v272, 5
      %v766 = vrot.slane %v272, 6
      %v767 = vrot.slane %v272, 7
      %v768 = vrot.slane %v273, 1
      %v769 = vrot.slane %v273, 2
      %v770 = vrot.slane %v273, 3
      %v771 = vrot.slane %v273, 4
      %v772 = vrot.slane %v273, 5
      %v773 = vrot.slane %v273, 6
      %v774 = vrot.slane %v273, 7
      %v791 = vadd.f32 %v653, %v272
      %v792 = vadd.f32 %v660, %v761
      %v793 = vadd.f32 %v667, %v762
      %v794 = vadd.f32 %v674, %v763
      %v795 = vadd.f32 %v681, %v764
      %v796 = vadd.f32 %v688, %v765
      %v797 = vadd.f32 %v695, %v766
      %v798 = vadd.f32 %v702, %v767
      %v799 = vadd.f32 %v709, %v273
      %v800 = vadd.f32 %v716, %v768
      %v801 = vadd.f32 %v723, %v769
      %v802 = vadd.f32 %v730, %v770
      %v803 = vadd.f32 %v737, %v771
      %v804 = vadd.f32 %v744, %v772
      %v805 = vadd.f32 %v751, %v773
      %v806 = vadd.f32 %v758, %v774
      %v823 = vrot.slane %v792, 7
      %v824 = vsel %vm461, %v823, %v791
      %v825 = vrot.slane %v793, 6
      %v826 = vsel %vm463, %v825, %v824
      %v827 = vrot.slane %v794, 5
      %v828 = vsel %vm465, %v827, %v826
      %v829 = vrot.slane %v795, 4
      %v830 = vsel %vm467, %v829, %v828
      %v831 = vrot.slane %v796, 3
      %v832 = vsel %vm469, %v831, %v830
      %v833 = vrot.slane %v797, 2
      %v834 = vsel %vm471, %v833, %v832
      %v835 = vrot.slane %v798, 1
      %v836 = vsel %vm473, %v835, %v834
      %v837 = vrot.slane %v800, 7
      %v838 = vsel %vm461, %v837, %v799
      %v839 = vrot.slane %v801, 6
      %v840 = vsel %vm463, %v839, %v838
      %v841 = vrot.slane %v802, 5
      %v842 = vsel %vm465, %v841, %v840
      %v843 = vrot.slane %v803, 4
      %v844 = vsel %vm467, %v843, %v842
      %v845 = vrot.slane %v804, 3
      %v846 = vsel %vm469, %v845, %v844
      %v847 = vrot.slane %v805, 2
      %v848 = vsel %vm471, %v847, %v846
      %v849 = vrot.slane %v806, 1
      %v850 = vsel %vm473, %v849, %v848
      %853 = vst.msk [vmem:[%s270] sm:$0xff] %vm302, %v836
      %854 = vst.msk [vmem:[%s270 + $0x8] sm:$0xff] %vm302, %v850
      %s855 = smul.u32 2, %s16
      %p856 = scmp.lt.s32.totalorder %s855, 7
      %s857 = scalar_select %p856, %s855, 7
      %s858 = smul.addr %s857, 8
      %s859 = scalar_lea.vmem %s5, %s858
      // Predicated region
      $region41: #{tpu_custom_call.1} parent=39 // pred_check
        %p860 = pneg %p154
      $region42: #{tpu_custom_call.1} parent=39 // pred_check_branch
        %862 = sbr.rel (%p860) target = $region44
      $region43: #{tpu_custom_call.1} parent=39 // pred_region
        %s863 = smul.u32 2, %s16
      $region44: #{tpu_custom_call.1} parent=39 // pred_fallthru
        _
    $region40: #{tpu_custom_call.1} parent=5 // pred_fallthru
      _
    %p864 = scmp.le.s32.totalorder 2, %s11
    // Predicated region
    $region45: #{tpu_custom_call.1} parent=5 // pred_check
      %p865 = pneg %p864
    $region46: #{tpu_custom_call.1} parent=5 // pred_check_branch
      %867 = sbr.rel (%p865) target = $region48
    $region47: #{tpu_custom_call.1} parent=5 // pred_region
      %s868 = ssub.s32 %s11, 2
      // Predicated region
      $region49: #{tpu_custom_call.1} parent=47 // pred_check
        %p869 = pneg %p160
      $region50: #{tpu_custom_call.1} parent=47 // pred_check_branch
        %871 = sbr.rel (%p869) target = $region52
      $region51: #{tpu_custom_call.1} parent=47 // pred_region
        %s872 = smul.u32 2, %s17
        %p873 = scmp.lt.s32.totalorder %s872, 7
        %s874 = scalar_select %p873, %s872, 7
        %s875 = smul.addr %s874, 8
        %s876 = scalar_lea.vmem %s5, %s875
      $region52: #{tpu_custom_call.1} parent=47 // pred_fallthru
        _
    $region48: #{tpu_custom_call.1} parent=5 // pred_fallthru
      _
  $region6: #{tpu_custom_call.1} parent=0 // loop_footer
    %s15 = sadd.s32 1, %s11
  $region7: #{tpu_custom_call.1} parent=0 // loop_footer_branch
    %10 = sbr.rel target = $region3
  $region8: #{tpu_custom_call.1} parent=0 // loop_exit
    _

</llo_original>
